<compile_context>
chip_gen: v7x
topology: tpu7x:2x2x1
jax: 0.10.0
libtpu: 0.0.40
codegen_flags: <defaults>
</compile_context>

<pallas_src>
import math
import functools

import jax
import jax.numpy as jnp
from jax import lax
from jax.experimental import pallas as pl
from jax.experimental.pallas import tpu as pltpu

EPS = 1e-5
_LANE = 128
_TARGET_TILE_BYTES = 2 * 1024 * 1024      # per-block footprint target
_VMEM_LIMIT_BYTES = 32 * 1024 * 1024      # fits v5e/v6e/v7x scoped VMEM


def _pick_hw_tile(c: int, hw: int, itemsize: int) -> int:
    """Largest lane-dense HW tile keeping the per-block footprint ~<=2 MiB."""
    if hw <= _LANE:
        return hw                          # full (possibly sub-128) last dim
    max_lanes = _TARGET_TILE_BYTES // max(1, c * itemsize)
    max_lanes = max(_LANE, (max_lanes // _LANE) * _LANE)
    if hw <= max_lanes:
        return hw                          # whole spatial extent in one block
    return max_lanes                       # multiple of 128


def _bn_stats_kernel(x_ref, g_ref, b_ref, scale_ref, shift_ref,
                     sum_ref, sq_ref, *, inv_count, hw, t_hw, needs_mask):
    """Pass 1: accumulate per-channel sum / sumsq; emit fused scale/shift.

    x_ref:     (C, t_hw) activation tile (one batch sample, one spatial tile)
    g_ref:     (C, 1)    gamma
    b_ref:     (C, 1)    beta
    scale_ref: (C, 1)    output  gamma * rsqrt(var + eps)
    shift_ref: (C, 1)    output  beta - mean * scale
    sum_ref:   (C, 1)    f32 scratch accumulator
    sq_ref:    (C, 1)    f32 scratch accumulator
    """
    step = pl.program_id(0) * pl.num_programs(1) + pl.program_id(1)
    total = pl.num_programs(0) * pl.num_programs(1)

    @pl.when(step == 0)
    def _():
        sum_ref[...] = jnp.zeros_like(sum_ref)
        sq_ref[...] = jnp.zeros_like(sq_ref)

    x = x_ref[...].astype(jnp.float32)                     # (C, t_hw)
    if needs_mask:
        hw_off = pl.program_id(1) * t_hw
        lane = lax.broadcasted_iota(jnp.int32, x.shape, 1)
        x = jnp.where(hw_off + lane < hw, x, 0.0)

    sum_ref[...] += jnp.sum(x, axis=-1, keepdims=True)     # (C, 1)
    sq_ref[...] += jnp.sum(x * x, axis=-1, keepdims=True)  # (C, 1)

    @pl.when(step == total - 1)
    def _():
        mean = sum_ref[...] * inv_count
        var = jnp.maximum(sq_ref[...] * inv_count - mean * mean, 0.0)
        inv = lax.rsqrt(var + EPS)
        scale = g_ref[...].astype(jnp.float32) * inv
        scale_ref[...] = scale
        shift_ref[...] = b_ref[...].astype(jnp.float32) - mean * scale


def _bn_apply_kernel(x_ref, scale_ref, shift_ref, o_ref):
    """Pass 2: y = x * scale + shift (per-channel broadcast over lanes)."""
    x = x_ref[...].astype(jnp.float32)                     # (C, t_hw)
    o_ref[...] = (x * scale_ref[...] + shift_ref[...]).astype(o_ref.dtype)


def _bn2d_pallas(x_nchw, gamma, beta):
    """BatchNorm2d forward (training-mode batch statistics) on NCHW input."""
    n, c, h, w = x_nchw.shape
    hw = h * w
    # NCHW is contiguous as (N, C, H*W): this reshape is a free view, no
    # transpose / extra HBM round trip.  Spatial dim is the (lane-dense) last axis.
    x3 = x_nchw.reshape(n, c, hw)
    g2 = gamma.reshape(c, 1).astype(jnp.float32)
    b2 = beta.reshape(c, 1).astype(jnp.float32)

    t_hw = _pick_hw_tile(c, hw, jnp.dtype(x_nchw.dtype).itemsize)
    n_hw_tiles = pl.cdiv(hw, t_hw)
    needs_mask = (hw % t_hw) != 0
    inv_count = 1.0 / float(n * hw)

    x_spec = pl.BlockSpec((None, c, t_hw), lambda i, j: (i, 0, j))
    vec_spec = pl.BlockSpec((c, 1), lambda i, j: (0, 0))

    stats_kernel = functools.partial(
        _bn_stats_kernel,
        inv_count=inv_count, hw=hw, t_hw=t_hw, needs_mask=needs_mask)

    scale, shift = pl.pallas_call(
        stats_kernel,
        out_shape=(jax.ShapeDtypeStruct((c, 1), jnp.float32),
                   jax.ShapeDtypeStruct((c, 1), jnp.float32)),
        grid=(n, n_hw_tiles),
        in_specs=[x_spec, vec_spec, vec_spec],
        out_specs=(vec_spec, vec_spec),
        scratch_shapes=[pltpu.VMEM((c, 1), jnp.float32),
                        pltpu.VMEM((c, 1), jnp.float32)],
        compiler_params=pltpu.CompilerParams(
            dimension_semantics=("arbitrary", "arbitrary"),
            vmem_limit_bytes=_VMEM_LIMIT_BYTES),
    )(x3, g2, b2)

    out3 = pl.pallas_call(
        _bn_apply_kernel,
        out_shape=jax.ShapeDtypeStruct((n, c, hw), x_nchw.dtype),
        grid=(n, n_hw_tiles),
        in_specs=[x_spec, vec_spec, vec_spec],
        out_specs=x_spec,
        compiler_params=pltpu.CompilerParams(
            dimension_semantics=("parallel", "parallel"),
            vmem_limit_bytes=_VMEM_LIMIT_BYTES),
    )(x3, scale, shift)

    return out3.reshape(n, c, h, w)


class SwitchableLayer1D:
    """JAX/Pallas port of SwitchableLayer1D with module_class = BatchNorm2d.

    Holds one (gamma, beta) pair per slim ratio; forward dispatches to the
    currently-selected width's parameters and runs the Pallas BN kernels.
    """

    def __init__(self, max_num_features: int, slim_ratios: list, key=None):
        self.max_num_features = max_num_features
        self.slim_ratios = sorted(slim_ratios)
        self._slim_ratio = max(self.slim_ratios)
        self.current_module_idx = len(self.slim_ratios) - 1

        if key is None:
            key = jax.random.PRNGKey(0)
        self.params = []
        for r in self.slim_ratios:
            width = int(math.ceil(r * max_num_features))
            key, kg, kb = jax.random.split(key, 3)
            # PyTorch default init is gamma=1, beta=0; perturb so the affine
            # path is exercised.
            gamma = 1.0 + 0.1 * jax.random.normal(kg, (width,), dtype=jnp.float32)
            beta = 0.1 * jax.random.normal(kb, (width,), dtype=jnp.float32)
            self.params.append((gamma, beta))

    @property
    def slim_ratio(self):
        return self._slim_ratio

    @slim_ratio.setter
    def slim_ratio(self, r):
        self.current_module_idx = self.slim_ratios.index(r)
        self._slim_ratio = r

    def __call__(self, x_nchw):
        # TODO(synk): running_mean/running_var tracking and eval-mode (use
        # running statistics) are not implemented; forward uses batch
        # statistics, matching PyTorch training-mode output math.
        gamma, beta = self.params[self.current_module_idx]
        assert x_nchw.shape[1] == gamma.shape[0], (
            "input channel count must match the selected sub-module width")
        return _bn2d_pallas(x_nchw, gamma, beta)


def _reference_bn(x_nchw, gamma, beta):
    x = x_nchw.astype(jnp.float32)
    mean = jnp.mean(x, axis=(0, 2, 3), keepdims=True)
    var = jnp.mean((x - mean) ** 2, axis=(0, 2, 3), keepdims=True)
    y = (x - mean) / jnp.sqrt(var + EPS)
    return (y * gamma[None, :, None, None] + beta[None, :, None, None]).astype(x_nchw.dtype)


if __name__ == "__main__":
    key = jax.random.PRNGKey(0)

    max_num_features = 8
    slim_ratios = [0.5, 1.0]
    layer = SwitchableLayer1D(max_num_features, slim_ratios,
                              key=jax.random.PRNGKey(0))

    # Select the full-width sub-module (ratio 1.0 -> 8 channels).
    layer.slim_ratio = 1.0
    n, c, h, w = 2, 8, 16, 16
    key, kx = jax.random.split(key)
    x = jax.random.normal(kx, (n, c, h, w), dtype=jnp.float32)

    y = jax.block_until_ready(layer(x))

    gamma, beta = layer.params[layer.current_module_idx]
    y_ref = _reference_bn(x, gamma, beta)
    assert y.shape == x.shape
    assert jnp.max(jnp.abs(y - y_ref)) < 1e-4

    # Also exercise the switch to the narrower sub-module (ratio 0.5 -> 4 ch).
    layer.slim_ratio = 0.5
    key, kx2 = jax.random.split(key)
    x_small = jax.random.normal(kx2, (n, 4, h, w), dtype=jnp.float32)
    y_small = jax.block_until_ready(layer(x_small))
    g2, b2 = layer.params[layer.current_module_idx]
    assert jnp.max(jnp.abs(y_small - _reference_bn(x_small, g2, b2))) < 1e-4

    print("KERNEL_OK")
</pallas_src>

<mosaic_0001>
module attributes {stable_mosaic.version = 11 : i64} {
  func.func @_bn_stats_kernel(%arg0: i32, %arg1: i32, %arg2: memref<1x8x256xf32, #tpu.memory_space<vmem>>, %arg3: memref<8x1xf32, #tpu.memory_space<vmem>>, %arg4: memref<8x1xf32, #tpu.memory_space<vmem>>, %arg5: memref<8x1xf32, #tpu.memory_space<vmem>>, %arg6: memref<8x1xf32, #tpu.memory_space<vmem>>, %arg7: memref<8x1xf32, #tpu.memory_space<vmem>>, %arg8: memref<8x1xf32, #tpu.memory_space<vmem>>) attributes {dimension_semantics = [#tpu.dimension_semantics<arbitrary>, #tpu.dimension_semantics<arbitrary>], iteration_bounds = array<i64: 2, 1>, scalar_prefetch = 0 : i64, scratch_operands = 2 : i64, tpu.core_type = #tpu.core_type<tc>, window_params = [{transform_indices = @transform_0, window_bounds = array<i64: 1, 8, 256>}, {pipeline_mode = #tpu.pipeline_mode<synchronous>, transform_indices = @transform_1, window_bounds = array<i64: 8, 1>}, {pipeline_mode = #tpu.pipeline_mode<synchronous>, transform_indices = @transform_2, window_bounds = array<i64: 8, 1>}, {pipeline_mode = #tpu.pipeline_mode<synchronous>, transform_indices = @transform_3, window_bounds = array<i64: 8, 1>}, {pipeline_mode = #tpu.pipeline_mode<synchronous>, transform_indices = @transform_4, window_bounds = array<i64: 8, 1>}]} {
    %c1_i32 = arith.constant 1 : i32
    %0 = arith.muli %arg0, %c1_i32 : i32
    %1 = arith.addi %0, %arg1 : i32
    %c0_i32 = arith.constant 0 : i32
    %2 = arith.cmpi eq, %1, %c0_i32 : i32
    %3 = arith.extui %2 : i1 to i32
    %c0_i32_0 = arith.constant 0 : i32
    %4 = arith.cmpi ne, %3, %c0_i32_0 : i32
    scf.if %4 {
      %cst_14 = arith.constant 0.000000e+00 : f32
      %21 = vector.broadcast %cst_14 : f32 to vector<8x1xf32>
      %c0_15 = arith.constant 0 : index
      %c0_16 = arith.constant 0 : index
      %22 = vector.load %arg7[%c0_15, %c0_16] : memref<8x1xf32, #tpu.memory_space<vmem>>, vector<8x1xf32>
      tpu.vector_store %arg7[%c0_15, %c0_16], %21 {strides = array<i32>} : memref<8x1xf32, #tpu.memory_space<vmem>>, vector<8x1xf32>,
      %cst_17 = arith.constant 0.000000e+00 : f32
      %23 = vector.broadcast %cst_17 : f32 to vector<8x1xf32>
      %c0_18 = arith.constant 0 : index
      %c0_19 = arith.constant 0 : index
      %24 = vector.load %arg8[%c0_18, %c0_19] : memref<8x1xf32, #tpu.memory_space<vmem>>, vector<8x1xf32>
      tpu.vector_store %arg8[%c0_18, %c0_19], %23 {strides = array<i32>} : memref<8x1xf32, #tpu.memory_space<vmem>>, vector<8x1xf32>,
    } else {
    }
    %c0 = arith.constant 0 : index
    %c0_1 = arith.constant 0 : index
    %c0_2 = arith.constant 0 : index
    %5 = vector.load %arg2[%c0, %c0_1, %c0_2] : memref<1x8x256xf32, #tpu.memory_space<vmem>>, vector<1x8x256xf32>
    %6 = vector.shape_cast %5 : vector<1x8x256xf32> to vector<8x256xf32>
    %c0_3 = arith.constant 0 : index
    %c0_4 = arith.constant 0 : index
    %7 = vector.load %arg7[%c0_3, %c0_4] : memref<8x1xf32, #tpu.memory_space<vmem>>, vector<8x1xf32>
    %cst = arith.constant dense<0.000000e+00> : vector<8xf32>
    %8 = vector.multi_reduction <add>, %6, %cst [1] : vector<8x256xf32> to vector<8xf32>
    %9 = vector.shape_cast %8 : vector<8xf32> to vector<8x1xf32>
    %10 = arith.addf %7, %9 : vector<8x1xf32>
    %c0_5 = arith.constant 0 : index
    %c0_6 = arith.constant 0 : index
    %11 = vector.load %arg7[%c0_5, %c0_6] : memref<8x1xf32, #tpu.memory_space<vmem>>, vector<8x1xf32>
    tpu.vector_store %arg7[%c0_5, %c0_6], %10 {strides = array<i32>} : memref<8x1xf32, #tpu.memory_space<vmem>>, vector<8x1xf32>,
    %c0_7 = arith.constant 0 : index
    %c0_8 = arith.constant 0 : index
    %12 = vector.load %arg8[%c0_7, %c0_8] : memref<8x1xf32, #tpu.memory_space<vmem>>, vector<8x1xf32>
    %13 = arith.mulf %6, %6 : vector<8x256xf32>
    %cst_9 = arith.constant dense<0.000000e+00> : vector<8xf32>
    %14 = vector.multi_reduction <add>, %13, %cst_9 [1] : vector<8x256xf32> to vector<8xf32>
    %15 = vector.shape_cast %14 : vector<8xf32> to vector<8x1xf32>
    %16 = arith.addf %12, %15 : vector<8x1xf32>
    %c0_10 = arith.constant 0 : index
    %c0_11 = arith.constant 0 : index
    %17 = vector.load %arg8[%c0_10, %c0_11] : memref<8x1xf32, #tpu.memory_space<vmem>>, vector<8x1xf32>
    tpu.vector_store %arg8[%c0_10, %c0_11], %16 {strides = array<i32>} : memref<8x1xf32, #tpu.memory_space<vmem>>, vector<8x1xf32>,
    %c1_i32_12 = arith.constant 1 : i32
    %18 = arith.cmpi eq, %1, %c1_i32_12 : i32
    %19 = arith.extui %18 : i1 to i32
    %c0_i32_13 = arith.constant 0 : i32
    %20 = arith.cmpi ne, %19, %c0_i32_13 : i32
    scf.if %20 {
      %c0_14 = arith.constant 0 : index
      %c0_15 = arith.constant 0 : index
      %21 = vector.load %arg7[%c0_14, %c0_15] : memref<8x1xf32, #tpu.memory_space<vmem>>, vector<8x1xf32>
      %cst_16 = arith.constant 0.001953125 : f32
      %22 = vector.broadcast %cst_16 : f32 to vector<8x1xf32>
      %23 = arith.mulf %21, %22 : vector<8x1xf32>
      %c0_17 = arith.constant 0 : index
      %c0_18 = arith.constant 0 : index
      %24 = vector.load %arg8[%c0_17, %c0_18] : memref<8x1xf32, #tpu.memory_space<vmem>>, vector<8x1xf32>
      %cst_19 = arith.constant 0.001953125 : f32
      %25 = vector.broadcast %cst_19 : f32 to vector<8x1xf32>
      %26 = arith.mulf %24, %25 : vector<8x1xf32>
      %27 = arith.mulf %23, %23 : vector<8x1xf32>
      %28 = arith.subf %26, %27 : vector<8x1xf32>
      %cst_20 = arith.constant 0.000000e+00 : f32
      %29 = vector.broadcast %cst_20 : f32 to vector<8x1xf32>
      %30 = arith.maximumf %28, %29 : vector<8x1xf32>
      %cst_21 = arith.constant 9.99999974E-6 : f32
      %31 = vector.broadcast %cst_21 : f32 to vector<8x1xf32>
      %32 = arith.addf %30, %31 : vector<8x1xf32>
      %33 = math.rsqrt %32 : vector<8x1xf32>
      %c0_22 = arith.constant 0 : index
      %c0_23 = arith.constant 0 : index
      %34 = vector.load %arg3[%c0_22, %c0_23] : memref<8x1xf32, #tpu.memory_space<vmem>>, vector<8x1xf32>
      %35 = arith.mulf %34, %33 : vector<8x1xf32>
      %c0_24 = arith.constant 0 : index
      %c0_25 = arith.constant 0 : index
      %36 = vector.load %arg5[%c0_24, %c0_25] : memref<8x1xf32, #tpu.memory_space<vmem>>, vector<8x1xf32>
      tpu.vector_store %arg5[%c0_24, %c0_25], %35 {strides = array<i32>} : memref<8x1xf32, #tpu.memory_space<vmem>>, vector<8x1xf32>,
      %c0_26 = arith.constant 0 : index
      %c0_27 = arith.constant 0 : index
      %37 = vector.load %arg4[%c0_26, %c0_27] : memref<8x1xf32, #tpu.memory_space<vmem>>, vector<8x1xf32>
      %38 = arith.mulf %23, %35 : vector<8x1xf32>
      %39 = arith.subf %37, %38 : vector<8x1xf32>
      %c0_28 = arith.constant 0 : index
      %c0_29 = arith.constant 0 : index
      %40 = vector.load %arg6[%c0_28, %c0_29] : memref<8x1xf32, #tpu.memory_space<vmem>>, vector<8x1xf32>
      tpu.vector_store %arg6[%c0_28, %c0_29], %39 {strides = array<i32>} : memref<8x1xf32, #tpu.memory_space<vmem>>, vector<8x1xf32>,
    } else {
    }
    return
  }
  func.func @transform_0(%arg0: i32, %arg1: i32) -> (i32, i32, i32) {
    %c0_i32 = arith.constant 0 : i32
    %c0_i32_0 = arith.constant 0 : i32
    return %arg0, %c0_i32, %arg1 : i32, i32, i32
  }
  func.func @transform_1(%arg0: i32, %arg1: i32) -> (i32, i32) {
    %c0_i32 = arith.constant 0 : i32
    %c0_i32_0 = arith.constant 0 : i32
    %c0_i32_1 = arith.constant 0 : i32
    return %c0_i32, %c0_i32_0 : i32, i32
  }
  func.func @transform_2(%arg0: i32, %arg1: i32) -> (i32, i32) {
    %c0_i32 = arith.constant 0 : i32
    %c0_i32_0 = arith.constant 0 : i32
    %c0_i32_1 = arith.constant 0 : i32
    return %c0_i32, %c0_i32_0 : i32, i32
  }
  func.func @transform_3(%arg0: i32, %arg1: i32) -> (i32, i32) {
    %c0_i32 = arith.constant 0 : i32
    %c0_i32_0 = arith.constant 0 : i32
    %c0_i32_1 = arith.constant 0 : i32
    return %c0_i32, %c0_i32_0 : i32, i32
  }
  func.func @transform_4(%arg0: i32, %arg1: i32) -> (i32, i32) {
    %c0_i32 = arith.constant 0 : i32
    %c0_i32_0 = arith.constant 0 : i32
    %c0_i32_1 = arith.constant 0 : i32
    return %c0_i32, %c0_i32_0 : i32, i32
  }
}

</mosaic_0001>

<llo_original>
// kernel: tpu_custom_call.1
$region0: #{tpu_custom_call.1}
  #allocation0 [shape = 'u32[]', space=smem, size = 0x4, offset = 0x4, fixed_abs, tag = 'smem constant byte address 0x4 - core index']
  #allocation1 [shape = 'u32[144,128]{1,0:T(1,128)}', space=vmem, size = 0x12000, scoped, tag = 'internal scratch']
  #allocation2 [shape = 'f32[8,1]{1,0:T(8,128)}', space=vmem, size = 0x1000, scoped, tag = 'scratch operand']
  #allocation3 [shape = 'f32[8,1]{1,0:T(8,128)}', space=vmem, size = 0x1000, scoped, tag = 'scratch operand']
  %s0 = inlined_call_operand.hbm [shape: f32[2,8,256], index: 0, kind: input, shape index: {}]
  %s1 = inlined_call_operand.vmem [shape: f32[8,1], index: 1, kind: input, shape index: {}]
  %s2 = inlined_call_operand.vmem [shape: f32[8,1], index: 2, kind: input, shape index: {}]
  %s3 = inlined_call_operand.vmem [shape: f32[8,1], index: 3, kind: output, shape index: {0}]
  %s4 = inlined_call_operand.vmem [shape: f32[8,1], index: 4, kind: output, shape index: {1}]
  %5 = xla_tuple %s3, %s4
  %s6 = sld [smem:[#allocation0]]
  $region65: #{tpu_custom_call.1} parent=0
    _
  %s8 = ssub.s32 1, %s6
  %s9 = scalar_select 0, %s8, %s6
  $region1: #{tpu_custom_call.1} parent=0
    #allocation4 [shape = 'u8[16384]{0}', space=vmem, size = 0x4000, scoped, tag = 'input window, operand 0']
    #allocation5 [shape = 's32[2]{0}', space=sflag, size = 0x8, scoped, tag = 'scoped memory for tpu_custom_call.1']
    %10 = vsyncpa [#allocation5], 0
    %s11 = scalar_lea.sflag [#allocation5], 1
    %12 = vsyncpa %s11, 0
    loop: start=0, step=1, limit=4
    $region2: #{tpu_custom_call.1} parent=1 // loop_pre_header
      _
    $region3: #{tpu_custom_call.1} parent=1 // loop_header
      %s14 = sphi 0, %s18
      %p15 = scmp.ge.s32.totalorder %s14, 4
      %s21 = sphi 0, %s33
      %s22 = sphi 0, %s29
      %s23 = sphi 0, %s21
      %s24 = sphi 0, %s22
      %s25 = sphi 0, %s23
      %s26 = sphi 0, %s24
      %s38 = sphi 0, %s40
      %s41 = sphi 0, %s38
      %s42 = sphi 0, %s41
      %s58 = sphi 0, %s42
      %s62 = sphi 0, %s62
      %s64 = sphi 0, %s62
      %s65 = sphi 0, %s64
      %s79 = sphi 0, %s65
      %s83 = sphi 0, %s83
      %s85 = sphi 0, %s83
      %s86 = sphi 0, %s85
      %s100 = sphi 0, %s86
      %s104 = sphi 0, %s104
      %s106 = sphi 0, %s104
      %s107 = sphi 0, %s106
      %s121 = sphi 0, %s107
      %s125 = sphi 0, %s125
      %s127 = sphi 0, %s125
      %s128 = sphi 0, %s127
      %s142 = sphi 0, %s128
    $region4: #{tpu_custom_call.1} parent=1 // loop_header_branch
      %17 = sbr.rel (%p15) target = $region8
    $region5: #{tpu_custom_call.1} parent=1 // loop_body
      %s19 = ssub.s32 %s14, 1
      %s20 = ssub.s32 %s14, 2
      %s27 = sadd.s32 1, %s22
      %p28 = scmp.ge.s32.totalorder %s27, 1
      %s29 = scalar_select %p28, 0, %s27
      %s30 = sadd.s32 1, %s21
      %s31 = scalar_select %p28, %s30, %s21
      %p32 = scmp.ge.s32.totalorder %s31, 2
      %s33 = scalar_select %p32, 0, %s31
      %s34 = ssub.s32 %s21, %s33
      %s35 = ssub.s32 %s22, %s29
      %s36 = sor.u32 %s34, %s35
      %p37 = scmp.eq.s32.totalorder %s36, 0
      %s39 = sadd.s32 %s38, 1
      %s40 = scalar_select %p37, %s38, %s39
      %p43 = pneg %p37
      %p44 = scmp.eq.s32.totalorder %s14, 1
      %p45 = por %p43, %p44
      %p46 = scmp.ne.s32.totalorder %s38, %s41
      %p47 = scmp.eq.s32.totalorder %s14, 0
      %p48 = por %p46, %p47
      %p49 = scmp.ne.s32.totalorder %s38, %s41
      %p50 = scmp.eq.s32.totalorder %s19, 1
      %p51 = por %p49, %p50
      %p52 = scmp.ne.s32.totalorder %s41, %s42
      %p53 = scmp.eq.s32.totalorder %s19, 0
      %p54 = por %p52, %p53
      %p55 = scmp.ne.s32.totalorder %s41, %s42
      %p56 = scmp.eq.s32.totalorder %s20, 1
      %p57 = por %p55, %p56
      %p59 = scmp.ne.s32.totalorder %s42, %s58
      %p60 = scmp.eq.s32.totalorder %s20, 0
      %p61 = por %p59, %p60
      %s63 = sadd.s32 %s62, 1
      %p66 = scmp.eq.s32.totalorder %s14, 1
      %p67 = scmp.ne.s32.totalorder %s62, %s64
      %p68 = scmp.eq.s32.totalorder %s14, 0
      %p69 = por %p67, %p68
      %p70 = scmp.ne.s32.totalorder %s62, %s64
      %p71 = scmp.eq.s32.totalorder %s19, 1
      %p72 = por %p70, %p71
      %p73 = scmp.ne.s32.totalorder %s64, %s65
      %p74 = scmp.eq.s32.totalorder %s19, 0
      %p75 = por %p73, %p74
      %p76 = scmp.ne.s32.totalorder %s64, %s65
      %p77 = scmp.eq.s32.totalorder %s20, 1
      %p78 = por %p76, %p77
      %p80 = scmp.ne.s32.totalorder %s65, %s79
      %p81 = scmp.eq.s32.totalorder %s20, 0
      %p82 = por %p80, %p81
      %s84 = sadd.s32 %s83, 1
      %p87 = scmp.eq.s32.totalorder %s14, 1
      %p88 = scmp.ne.s32.totalorder %s83, %s85
      %p89 = scmp.eq.s32.totalorder %s14, 0
      %p90 = por %p88, %p89
      %p91 = scmp.ne.s32.totalorder %s83, %s85
      %p92 = scmp.eq.s32.totalorder %s19, 1
      %p93 = por %p91, %p92
      %p94 = scmp.ne.s32.totalorder %s85, %s86
      %p95 = scmp.eq.s32.totalorder %s19, 0
      %p96 = por %p94, %p95
      %p97 = scmp.ne.s32.totalorder %s85, %s86
      %p98 = scmp.eq.s32.totalorder %s20, 1
      %p99 = por %p97, %p98
      %p101 = scmp.ne.s32.totalorder %s86, %s100
      %p102 = scmp.eq.s32.totalorder %s20, 0
      %p103 = por %p101, %p102
      %s105 = sadd.s32 %s104, 1
      %p108 = scmp.eq.s32.totalorder %s14, 1
      %p109 = scmp.ne.s32.totalorder %s104, %s106
      %p110 = scmp.eq.s32.totalorder %s14, 0
      %p111 = por %p109, %p110
      %p112 = scmp.ne.s32.totalorder %s104, %s106
      %p113 = scmp.eq.s32.totalorder %s19, 1
      %p114 = por %p112, %p113
      %p115 = scmp.ne.s32.totalorder %s106, %s107
      %p116 = scmp.eq.s32.totalorder %s19, 0
      %p117 = por %p115, %p116
      %p118 = scmp.ne.s32.totalorder %s106, %s107
      %p119 = scmp.eq.s32.totalorder %s20, 1
      %p120 = por %p118, %p119
      %p122 = scmp.ne.s32.totalorder %s107, %s121
      %p123 = scmp.eq.s32.totalorder %s20, 0
      %p124 = por %p122, %p123
      %s126 = sadd.s32 %s125, 1
      %p129 = scmp.eq.s32.totalorder %s14, 1
      %p130 = scmp.ne.s32.totalorder %s125, %s127
      %p131 = scmp.eq.s32.totalorder %s14, 0
      %p132 = por %p130, %p131
      %p133 = scmp.ne.s32.totalorder %s125, %s127
      %p134 = scmp.eq.s32.totalorder %s19, 1
      %p135 = por %p133, %p134
      %p136 = scmp.ne.s32.totalorder %s127, %s128
      %p137 = scmp.eq.s32.totalorder %s19, 0
      %p138 = por %p136, %p137
      %p139 = scmp.ne.s32.totalorder %s127, %s128
      %p140 = scmp.eq.s32.totalorder %s20, 1
      %p141 = por %p139, %p140
      %p143 = scmp.ne.s32.totalorder %s128, %s142
      %p144 = scmp.eq.s32.totalorder %s20, 0
      %p145 = por %p143, %p144
      %p146 = scmp.le.s32.totalorder 1, %s14
      %p147 = scmp.lt.s32.totalorder %s14, 3
      %p148 = pnand %p146, %p147
      %p149 = pneg %p148
      // Predicated region
      $region9: #{tpu_custom_call.1} parent=5 // pred_check
        _
      $region10: #{tpu_custom_call.1} parent=5 // pred_check_branch
        %151 = sbr.rel (%p148) target = $region12
      $region11: #{tpu_custom_call.1} parent=5 // pred_region
        %s152 = ssub.s32 %s14, 1
        // Predicated region
        $region13: #{tpu_custom_call.1} parent=11 // pred_check
          %p153 = pneg %p75
        $region14: #{tpu_custom_call.1} parent=11 // pred_check_branch
          %155 = sbr.rel (%p153) target = $region16
        $region15: #{tpu_custom_call.1} parent=11 // pred_region
          _
        $region16: #{tpu_custom_call.1} parent=11 // pred_fallthru
          _
        // Predicated region
        $region17: #{tpu_custom_call.1} parent=11 // pred_check
          %p156 = pneg %p96
        $region18: #{tpu_custom_call.1} parent=11 // pred_check_branch
          %158 = sbr.rel (%p156) target = $region20
        $region19: #{tpu_custom_call.1} parent=11 // pred_region
          _
        $region20: #{tpu_custom_call.1} parent=11 // pred_fallthru
          _
      $region12: #{tpu_custom_call.1} parent=5 // pred_fallthru
        _
      %p159 = scmp.lt.s32.totalorder %s14, 2
      // Predicated region
      $region21: #{tpu_custom_call.1} parent=5 // pred_check
        %p160 = pneg %p159
      $region22: #{tpu_custom_call.1} parent=5 // pred_check_branch
        %162 = sbr.rel (%p160) target = $region24
      $region23: #{tpu_custom_call.1} parent=5 // pred_region
        // Predicated region
        $region25: #{tpu_custom_call.1} parent=23 // pred_check
          %p163 = pneg %p48
        $region26: #{tpu_custom_call.1} parent=23 // pred_check_branch
          %165 = sbr.rel (%p163) target = $region28
        $region27: #{tpu_custom_call.1} parent=23 // pred_region
          %s166 = sand.u32 %s38, 1
          %s167 = scalar_lea.sflag [#allocation5], %s166
          %s168 = sand.u32 %s38, 1
          %s169 = smul.addr %s168, 16
          %s170 = scalar_lea.vmem [#allocation4], %s169
          %s171 = smul.u32 2, %s22
          %s173 = ssub.s32 256, 256
          %174 = vsyncadd %s167, %s173
          %s175 = smul.addr %s21, 2
          %s176 = sadd.s32 %s171, %s175
          %s177 = smul.addr %s176, 128
          %s178 = scalar_lea.hbm %s0, %s177
          %s180 = sshll.u32 %s170, 4
          %s181 = int_to_ptr.vmem [resolvable:$true] %s180
          %183 = dma.hbm_to_vmem [thread:$0]  %s178, 256, %s181, %s167
        $region28: #{tpu_custom_call.1} parent=23 // pred_fallthru
          _
      $region24: #{tpu_custom_call.1} parent=5 // pred_fallthru
        _
      %p184 = scmp.le.s32.totalorder 1, %s14
      %p185 = scmp.lt.s32.totalorder %s14, 3
      %p186 = pnand %p184, %p185
      %p187 = pneg %p186
      // Predicated region
      $region29: #{tpu_custom_call.1} parent=5 // pred_check
        _
      $region30: #{tpu_custom_call.1} parent=5 // pred_check_branch
        %189 = sbr.rel (%p186) target = $region32
      $region31: #{tpu_custom_call.1} parent=5 // pred_region
        %s190 = ssub.s32 %s14, 1
        %s191 = sand.u32 %s41, 1
        %s192 = scalar_lea.sflag [#allocation5], %s191
        %s193 = sand.u32 %s41, 1
        %s194 = smul.addr %s193, 16
        %s195 = scalar_lea.vmem [#allocation4], %s194
        // Predicated region
        $region33: #{tpu_custom_call.1} parent=31 // pred_check
          %p196 = pneg %p54
        $region34: #{tpu_custom_call.1} parent=31 // pred_check_branch
          %198 = sbr.rel (%p196) target = $region36
        $region35: #{tpu_custom_call.1} parent=31 // pred_region
          %199 = dma.done %s192, 256
        $region36: #{tpu_custom_call.1} parent=31 // pred_fallthru
          _
        %s200 = sand.u32 %s41, 1
        %s201 = scalar_lea.sflag [#allocation5], %s200
        %s202 = sand.u32 %s41, 1
        %s203 = smul.addr %s202, 16
        %s204 = scalar_lea.vmem [#allocation4], %s203
        %p205 = pneg %p54
        %p206 = pneg %p51
        %p207 = pneg %p75
        %p208 = pneg %p72
        %p209 = pneg %p96
        %p210 = pneg %p93
        %p211 = pneg %p117
        %p212 = pneg %p114
        %p213 = pneg %p138
        %p214 = pneg %p135
        %s215 = smul.u32 2, %s24
        %s216 = sadd.s32 %s23, %s24
        %p217 = scmp.eq.s32.totalorder %s216, 0
        // Predicated region
        $region37: #{tpu_custom_call.1} parent=31 // pred_check
          %p218 = pneg %p217
        $region38: #{tpu_custom_call.1} parent=31 // pred_check_branch
          %220 = sbr.rel (%p218) target = $region40
        $region39: #{tpu_custom_call.1} parent=31 // pred_region
          %vm221 = vcmask 7168
          %222 = vst.msk [vmem:[#allocation2] sm:$0xff] %vm221, 0.0
          %223 = vst.msk [vmem:[#allocation3] sm:$0xff] %vm221, 0.0
        $region40: #{tpu_custom_call.1} parent=31 // pred_fallthru
          _
        %v224 = vld [vmem:[%s195] sm:$0xff]
        %v225 = vld [vmem:[%s195 + $0x8] sm:$0xff]
        %v226 = vld [vmem:[#allocation2] sm:$0xff]
        %v227 = vadd.f32 %v224, %v225
        %228 = vadd.xlane.f32.xlu0 %v227
        %v229 = vpop.xlane.xlu0 %228
        %v230 = vadd.f32 %v226, %v229
        %vm231 = vcmask 7168
        %232 = vst.msk [vmem:[#allocation2] sm:$0xff] %vm231, %v230
        %v233 = vld [vmem:[#allocation3] sm:$0xff]
        %v234 = vmul.f32 %v224, %v224
        %v235 = vmul.f32 %v225, %v225
        %v236 = vadd.f32 %v234, %v235
        %237 = vadd.xlane.f32.xlu0 %v236
        %v238 = vpop.xlane.xlu0 %237
        %v239 = vadd.f32 %v233, %v238
        %240 = vst.msk [vmem:[#allocation3] sm:$0xff] %vm231, %v239
        %p241 = scmp.eq.s32.totalorder %s216, 1
        // Predicated region
        $region41: #{tpu_custom_call.1} parent=31 // pred_check
          %p242 = pneg %p241
        $region42: #{tpu_custom_call.1} parent=31 // pred_check_branch
          %244 = sbr.rel (%p242) target = $region44
        $region43: #{tpu_custom_call.1} parent=31 // pred_region
          %v245 = vld [vmem:[#allocation2] sm:$0xff]
          %v246 = vmul.f32 %v245, 0.001953125
          %v247 = vld [vmem:[#allocation3] sm:$0xff]
          %v248 = vmul.f32 %v247, 0.001953125
          %v249 = vmul.f32 %v246, %v246
          %v250 = vsub.f32 %v248, %v249
          %v251 = vmax.f32 %v250, 0.0
          %v252 = vadd.f32 %v251, 1e-05
          %v253 = vrsqrt.pop %v252
          %v254 = vld [vmem:[%s1] sm:$0xff]
          %v255 = vmul.f32 %v254, %v253
          %256 = vst.msk [vmem:[%s3] sm:$0xff] %vm231, %v255
          %v257 = vld [vmem:[%s2] sm:$0xff]
          %v258 = vmul.f32 %v246, %v255
          %v259 = vsub.f32 %v257, %v258
          %260 = vst.msk [vmem:[%s4] sm:$0xff] %vm231, %v259
        $region44: #{tpu_custom_call.1} parent=31 // pred_fallthru
          _
        // Predicated region
        $region45: #{tpu_custom_call.1} parent=31 // pred_check
          %p261 = pneg %p114
        $region46: #{tpu_custom_call.1} parent=31 // pred_check_branch
          %263 = sbr.rel (%p261) target = $region48
        $region47: #{tpu_custom_call.1} parent=31 // pred_region
          _
        $region48: #{tpu_custom_call.1} parent=31 // pred_fallthru
          _
        // Predicated region
        $region49: #{tpu_custom_call.1} parent=31 // pred_check
          %p264 = pneg %p135
        $region50: #{tpu_custom_call.1} parent=31 // pred_check_branch
          %266 = sbr.rel (%p264) target = $region52
        $region51: #{tpu_custom_call.1} parent=31 // pred_region
          _
        $region52: #{tpu_custom_call.1} parent=31 // pred_fallthru
          _
        // Predicated region
        $region53: #{tpu_custom_call.1} parent=31 // pred_check
          %p267 = pneg %p114
        $region54: #{tpu_custom_call.1} parent=31 // pred_check_branch
          %269 = sbr.rel (%p267) target = $region56
        $region55: #{tpu_custom_call.1} parent=31 // pred_region
          _
        $region56: #{tpu_custom_call.1} parent=31 // pred_fallthru
          _
        // Predicated region
        $region57: #{tpu_custom_call.1} parent=31 // pred_check
          %p270 = pneg %p135
        $region58: #{tpu_custom_call.1} parent=31 // pred_check_branch
          %272 = sbr.rel (%p270) target = $region60
        $region59: #{tpu_custom_call.1} parent=31 // pred_region
          _
        $region60: #{tpu_custom_call.1} parent=31 // pred_fallthru
          _
      $region32: #{tpu_custom_call.1} parent=5 // pred_fallthru
        _
      %p273 = scmp.le.s32.totalorder 2, %s14
      // Predicated region
      $region61: #{tpu_custom_call.1} parent=5 // pred_check
        %p274 = pneg %p273
      $region62: #{tpu_custom_call.1} parent=5 // pred_check_branch
        %276 = sbr.rel (%p274) target = $region64
      $region63: #{tpu_custom_call.1} parent=5 // pred_region
        %s277 = ssub.s32 %s14, 2
      $region64: #{tpu_custom_call.1} parent=5 // pred_fallthru
        _
    $region6: #{tpu_custom_call.1} parent=1 // loop_footer
      %s18 = sadd.s32 1, %s14
    $region7: #{tpu_custom_call.1} parent=1 // loop_footer_branch
      %13 = sbr.rel target = $region3
    $region8: #{tpu_custom_call.1} parent=1 // loop_exit
      _
    %278 = vsyncpa [#allocation5], 1
    %s279 = scalar_lea.sflag [#allocation5], 1
    %280 = vsyncpa %s279, 1

</llo_original>
